<compile_context>
chip_gen: v6e
topology: v6e:2x2x1
jax: 0.10.0
libtpu: 0.0.40
codegen_flags: <defaults>
</compile_context>

<pallas_src>
import numpy as np
import jax
import jax.numpy as jnp
from jax.experimental import pallas as pl
from jax.experimental.pallas import tpu as pltpu

KERNEL = 7
STRIDE = 2
PAD = 3
OUT_PAD = 1
NEG_SLOPE = 0.2


def unet_up_kernel(xp_ref, w_ref, o_ref):
    # xp_ref: (1, Cin, L+3)   compact input, channels-first, zero-padded (1 left, 2 right)
    # w_ref:  (2*Cout, 4*Cin) packed polyphase weights (rows [0:Cout]=even, [Cout:]=odd)
    # o_ref:  (1, 2*Cout, L)  phase-planar conv output after LeakyReLU (lane-dense stores)
    L = o_ref.shape[2]
    xp = xp_ref[0]  # (Cin, L+3)

    # im2col slab: rows (j, ci), columns m; slab[j*Cin+ci, m] = xp[ci, m+j] = x[ci, m-1+j]
    slab = jnp.concatenate(
        [xp[:, 0:L], xp[:, 1:L + 1], xp[:, 2:L + 2], xp[:, 3:L + 3]], axis=0
    )  # (4*Cin, L)

    # Single fused MXU matmul: both output phases at once, f32 accumulation.
    acc = jnp.dot(w_ref[...], slab, preferred_element_type=jnp.float32)  # (2*Cout, L)

    y = jnp.where(acc > 0, acc, NEG_SLOPE * acc)  # LeakyReLU(0.2)
    o_ref[0, :, :] = y.astype(o_ref.dtype)


def unet_up(x_ncl, skip_ncl, weight, *, compute_dtype=jnp.float32):
    """x_ncl: (N, Cin, L), skip_ncl: (N, Cskip, 2L), weight: (Cin, Cout, K) [torch layout].
    Returns (N, Cout + Cskip, 2L) float32 (PyTorch NCL layout).
    compute_dtype=jnp.bfloat16 is recommended on v6e/v7x (halves HBM traffic; acc stays f32)."""
    N, Cin, L = x_ncl.shape
    Cout = weight.shape[1]
    Lo = (L - 1) * STRIDE - 2 * PAD + KERNEL + OUT_PAD
    assert Lo == 2 * L

    # Compact padded input: xp[:, :, q] = x[:, :, q-1], zeros at q=0 and q=L+1, L+2.
    x_pad = jnp.pad(x_ncl.astype(compute_dtype), ((0, 0), (0, 0), (1, 2)))  # (N, Cin, L+3)

    # Polyphase weight packing.  Output position t = 2m+p:
    #   even (p=0): taps k=5,3,1 paired with x[m-1], x[m], x[m+1]
    #   odd  (p=1): taps k=6,4,2,0 paired with x[m-1], x[m], x[m+1], x[m+2]
    w = weight.astype(compute_dtype)                       # (Cin, Cout, K)
    zeros = jnp.zeros((Cin, Cout), compute_dtype)
    w_even = jnp.stack([w[:, :, 5], w[:, :, 3], w[:, :, 1], zeros], axis=0)        # (4,Cin,Cout)
    w_odd = jnp.stack([w[:, :, 6], w[:, :, 4], w[:, :, 2], w[:, :, 0]], axis=0)    # (4,Cin,Cout)
    w_big = jnp.concatenate(
        [w_even.reshape(4 * Cin, Cout).T, w_odd.reshape(4 * Cin, Cout).T], axis=0
    )  # (2*Cout, 4*Cin)

    itemsize = jnp.dtype(compute_dtype).itemsize
    cost = pl.CostEstimate(
        flops=2 * N * (2 * Cout) * (4 * Cin) * L,
        transcendentals=0,
        bytes_accessed=(x_pad.size * itemsize + N * w_big.size * itemsize
                        + N * 2 * Cout * L * 4),
    )

    # NOTE: whole-L blocks per batch element; for very long sequences / wide channels
    # (esp. v7x's 64 MiB VMEM) add an L-tile grid axis with a (K-1)-column halo.
    out = pl.pallas_call(
        unet_up_kernel,
        out_shape=jax.ShapeDtypeStruct((N, 2 * Cout, L), jnp.float32),
        grid=(N,),
        in_specs=[
            pl.BlockSpec((1, Cin, L + 3), lambda n: (n, 0, 0)),
            pl.BlockSpec((2 * Cout, 4 * Cin), lambda n: (0, 0)),
        ],
        out_specs=pl.BlockSpec((1, 2 * Cout, L), lambda n: (n, 0, 0)),
        compiler_params=pltpu.CompilerParams(dimension_semantics=("parallel",)),
        cost_estimate=cost,
    )(x_pad, w_big)

    # Interleave phases (free leading-split reshape + tiny minor transpose) and concat skip.
    y = out.reshape(N, 2, Cout, L).transpose(0, 2, 3, 1).reshape(N, Cout, Lo)
    return jnp.concatenate([y, skip_ncl.astype(jnp.float32)], axis=1)


def ref_unet_up(x, skip, weight):
    """Pure numpy reference of the PyTorch forward (dropout=0.0)."""
    xn = np.asarray(x, np.float32)
    wn = np.asarray(weight, np.float32)
    sn = np.asarray(skip, np.float32)
    N, Cin, L = xn.shape
    Cout = wn.shape[1]
    Lo = 2 * L
    y = np.zeros((N, Cout, Lo), np.float32)
    for n in range(N):
        for ci in range(Cin):
            for l in range(L):
                for k in range(KERNEL):
                    t = l * STRIDE - PAD + k
                    if 0 <= t < Lo:
                        y[n, :, t] += xn[n, ci, l] * wn[ci, :, k]
    y = np.where(y > 0, y, NEG_SLOPE * y)
    return np.concatenate([y, sn], axis=1)


if __name__ == "__main__":
    # Small shapes consistent with the module: in_size=4, out_size=8, batch=2, length=8.
    N, Cin, Cout, L = 2, 4, 8, 8
    Cskip = Cout  # typical UNet skip
    key = jax.random.PRNGKey(0)
    kx, ks, kw = jax.random.split(key, 3)

    x = jax.random.normal(kx, (N, Cin, L), jnp.float32)             # PyTorch NCL input
    skip = jax.random.normal(ks, (N, Cskip, 2 * L), jnp.float32)    # skip at upsampled length
    # ConvTranspose1d weight shape: (in_channels, out_channels, kernel_size), bias=False
    weight = jax.random.normal(kw, (Cin, Cout, KERNEL), jnp.float32) * 0.1
    # TODO(synk): nn.Dropout path omitted (module default dropout=0.0; identity in eval).

    out = unet_up(x, skip, weight)
    out = jax.block_until_ready(out)

    ref = ref_unet_up(x, skip, weight)
    assert out.shape == (N, Cout + Cskip, 2 * L), out.shape
    np.testing.assert_allclose(np.asarray(out), ref, rtol=1e-4, atol=1e-4)
    print("KERNEL_OK")
</pallas_src>

<mosaic_0001>
module attributes {stable_mosaic.version = 11 : i64} {
  func.func @unet_up_kernel(%arg0: i32, %arg1: memref<1x4x11xf32, #tpu.memory_space<vmem>>, %arg2: memref<16x16xf32, #tpu.memory_space<vmem>>, %arg3: memref<1x16x8xf32, #tpu.memory_space<vmem>>) attributes {dimension_semantics = [#tpu.dimension_semantics<parallel>], iteration_bounds = array<i64: 2>, scalar_prefetch = 0 : i64, scratch_operands = 0 : i64, tpu.core_type = #tpu.core_type<tc>, window_params = [{transform_indices = @transform_0, window_bounds = array<i64: 1, 4, 11>}, {pipeline_mode = #tpu.pipeline_mode<synchronous>, transform_indices = @transform_1, window_bounds = array<i64: 16, 16>}, {transform_indices = @transform_2, window_bounds = array<i64: 1, 16, 8>}]} {
    %c0 = arith.constant 0 : index
    %c0_0 = arith.constant 0 : index
    %c0_1 = arith.constant 0 : index
    %0 = vector.load %arg1[%c0, %c0_0, %c0_1] : memref<1x4x11xf32, #tpu.memory_space<vmem>>, vector<1x4x11xf32>
    %1 = vector.shape_cast %0 : vector<1x4x11xf32> to vector<4x11xf32>
    %2 = vector.extract_strided_slice %1 {offsets = [0, 0], sizes = [4, 8], strides = [1, 1]} : vector<4x11xf32> to vector<4x8xf32>
    %3 = vector.extract_strided_slice %1 {offsets = [0, 1], sizes = [4, 8], strides = [1, 1]} : vector<4x11xf32> to vector<4x8xf32>
    %4 = vector.extract_strided_slice %1 {offsets = [0, 2], sizes = [4, 8], strides = [1, 1]} : vector<4x11xf32> to vector<4x8xf32>
    %5 = vector.extract_strided_slice %1 {offsets = [0, 3], sizes = [4, 8], strides = [1, 1]} : vector<4x11xf32> to vector<4x8xf32>
    %6 = tpu.concatenate %2, %3, %4, %5 in 0 : vector<4x8xf32>, vector<4x8xf32>, vector<4x8xf32>, vector<4x8xf32> -> vector<16x8xf32>
    %c0_2 = arith.constant 0 : index
    %c0_3 = arith.constant 0 : index
    %7 = vector.load %arg2[%c0_2, %c0_3] : memref<16x16xf32, #tpu.memory_space<vmem>>, vector<16x16xf32>
    %cst = arith.constant dense<0.000000e+00> : vector<16x8xf32>
    %8 = tpu.matmul %7, %6, %cst {dimension_numbers = #tpu.dot_dimension_numbers<[1], [0], [0], [1], [0, 0, 1, 1], [], []>} : vector<16x16xf32>, vector<16x8xf32>, vector<16x8xf32> -> vector<16x8xf32>
    %cst_4 = arith.constant 0.000000e+00 : f32
    %9 = vector.broadcast %cst_4 : f32 to vector<16x8xf32>
    %10 = arith.cmpf ogt, %8, %9 : vector<16x8xf32>
    %cst_5 = arith.constant 2.000000e-01 : f32
    %11 = vector.broadcast %cst_5 : f32 to vector<16x8xf32>
    %12 = arith.mulf %11, %8 : vector<16x8xf32>
    %13 = arith.select %10, %8, %12 : vector<16x8xi1>, vector<16x8xf32>
    %c0_6 = arith.constant 0 : index
    %c0_7 = arith.constant 0 : index
    %c0_8 = arith.constant 0 : index
    %14 = vector.load %arg3[%c0_6, %c0_7, %c0_8] : memref<1x16x8xf32, #tpu.memory_space<vmem>>, vector<1x16x8xf32>
    %15 = vector.shape_cast %14 : vector<1x16x8xf32> to vector<16x8xf32>
    %16 = vector.shape_cast %13 : vector<16x8xf32> to vector<1x16x8xf32>
    tpu.vector_store %arg3[%c0_6, %c0_7, %c0_8], %16 {strides = array<i32>} : memref<1x16x8xf32, #tpu.memory_space<vmem>>, vector<1x16x8xf32>,
    return
  }
  func.func @transform_0(%arg0: i32) -> (i32, i32, i32) {
    %c0_i32 = arith.constant 0 : i32
    %c0_i32_0 = arith.constant 0 : i32
    %c0_i32_1 = arith.constant 0 : i32
    return %arg0, %c0_i32, %c0_i32_0 : i32, i32, i32
  }
  func.func @transform_1(%arg0: i32) -> (i32, i32) {
    %c0_i32 = arith.constant 0 : i32
    %c0_i32_0 = arith.constant 0 : i32
    %c0_i32_1 = arith.constant 0 : i32
    return %c0_i32, %c0_i32_0 : i32, i32
  }
  func.func @transform_2(%arg0: i32) -> (i32, i32, i32) {
    %c0_i32 = arith.constant 0 : i32
    %c0_i32_0 = arith.constant 0 : i32
    %c0_i32_1 = arith.constant 0 : i32
    return %arg0, %c0_i32, %c0_i32_0 : i32, i32, i32
  }
}

</mosaic_0001>

<llo_original>
// kernel: tpu_custom_call.1
$region0: #{tpu_custom_call.1}
  #allocation0 [shape = 'u32[]', space=smem, size = 0x4, offset = 0x4, fixed_abs, tag = 'smem constant byte address 0x4 - core index']
  #allocation1 [shape = 'u32[144,128]{1,0:T(1,128)}', space=vmem, size = 0x12000, scoped, tag = 'internal scratch']
  %s0 = inlined_call_operand.hbm [shape: f32[2,4,11], index: 0, kind: input, shape index: {}]
  %s1 = inlined_call_operand.hbm [shape: f32[16,16], index: 1, kind: input, shape index: {}]
  %s2 = inlined_call_operand.vmem [shape: f32[2,16,8], index: 2, kind: output, shape index: {}]
  %s3 = sld [smem:[#allocation0]]
  $region49: #{tpu_custom_call.1} parent=0
    _
  %s5 = ssub.s32 1, %s3
  %s6 = scalar_select 0, %s5, %s3
  $region1: #{tpu_custom_call.1} parent=0
    #allocation2 [shape = 'u8[4096]{0}', space=vmem, size = 0x1000, scoped, tag = 'input window, operand 0']
    #allocation3 [shape = 's32[2]{0}', space=sflag, size = 0x8, scoped, tag = 'scoped memory for tpu_custom_call.1']
    #allocation4 [shape = 'u8[8192]{0}', space=vmem, size = 0x2000, scoped, tag = 'input window, operand 1, single buffered']
    #allocation5 [shape = 's32[1]{0}', space=sflag, size = 0x4, scoped, tag = 'scoped memory for tpu_custom_call.1']
    %7 = vsyncpa [#allocation3], 0
    %s8 = scalar_lea.sflag [#allocation3], 1
    %9 = vsyncpa %s8, 0
    %10 = vsyncpa [#allocation5], 0
    loop: start=0, step=1, limit=4
    $region2: #{tpu_custom_call.1} parent=1 // loop_pre_header
      _
    $region3: #{tpu_custom_call.1} parent=1 // loop_header
      %s12 = sphi 0, %s16
      %p13 = scmp.ge.s32.totalorder %s12, 4
      %s22 = sphi 0, %s24
      %s25 = sphi 0, %s22
      %s26 = sphi 0, %s25
      %s42 = sphi 0, %s26
      %s46 = sphi 0, %s46
      %s48 = sphi 0, %s46
      %s49 = sphi 0, %s48
      %s63 = sphi 0, %s49
      %s69 = sphi 0, %s71
      %s72 = sphi 0, %s69
      %s73 = sphi 0, %s72
      %s89 = sphi 0, %s73
    $region4: #{tpu_custom_call.1} parent=1 // loop_header_branch
      %15 = sbr.rel (%p13) target = $region8
    $region5: #{tpu_custom_call.1} parent=1 // loop_body
      %s17 = ssub.s32 %s12, 1
      %s18 = ssub.s32 %s12, 2
      %s19 = sadd.s32 %s12, 1
      %s20 = ssub.s32 %s12, %s19
      %p21 = scmp.eq.s32.totalorder %s20, 0
      %s23 = sadd.s32 %s22, 1
      %s24 = scalar_select %p21, %s22, %s23
      %p27 = pneg %p21
      %p28 = scmp.eq.s32.totalorder %s12, 1
      %p29 = por %p27, %p28
      %p30 = scmp.ne.s32.totalorder %s22, %s25
      %p31 = scmp.eq.s32.totalorder %s12, 0
      %p32 = por %p30, %p31
      %p33 = scmp.ne.s32.totalorder %s22, %s25
      %p34 = scmp.eq.s32.totalorder %s17, 1
      %p35 = por %p33, %p34
      %p36 = scmp.ne.s32.totalorder %s25, %s26
      %p37 = scmp.eq.s32.totalorder %s17, 0
      %p38 = por %p36, %p37
      %p39 = scmp.ne.s32.totalorder %s25, %s26
      %p40 = scmp.eq.s32.totalorder %s18, 1
      %p41 = por %p39, %p40
      %p43 = scmp.ne.s32.totalorder %s26, %s42
      %p44 = scmp.eq.s32.totalorder %s18, 0
      %p45 = por %p43, %p44
      %s47 = sadd.s32 %s46, 1
      %p50 = scmp.eq.s32.totalorder %s12, 1
      %p51 = scmp.ne.s32.totalorder %s46, %s48
      %p52 = scmp.eq.s32.totalorder %s12, 0
      %p53 = por %p51, %p52
      %p54 = scmp.ne.s32.totalorder %s46, %s48
      %p55 = scmp.eq.s32.totalorder %s17, 1
      %p56 = por %p54, %p55
      %p57 = scmp.ne.s32.totalorder %s48, %s49
      %p58 = scmp.eq.s32.totalorder %s17, 0
      %p59 = por %p57, %p58
      %p60 = scmp.ne.s32.totalorder %s48, %s49
      %p61 = scmp.eq.s32.totalorder %s18, 1
      %p62 = por %p60, %p61
      %p64 = scmp.ne.s32.totalorder %s49, %s63
      %p65 = scmp.eq.s32.totalorder %s18, 0
      %p66 = por %p64, %p65
      %s67 = ssub.s32 %s12, %s19
      %p68 = scmp.eq.s32.totalorder %s67, 0
      %s70 = sadd.s32 %s69, 1
      %s71 = scalar_select %p68, %s69, %s70
      %p74 = pneg %p68
      %p75 = scmp.eq.s32.totalorder %s12, 1
      %p76 = por %p74, %p75
      %p77 = scmp.ne.s32.totalorder %s69, %s72
      %p78 = scmp.eq.s32.totalorder %s12, 0
      %p79 = por %p77, %p78
      %p80 = scmp.ne.s32.totalorder %s69, %s72
      %p81 = scmp.eq.s32.totalorder %s17, 1
      %p82 = por %p80, %p81
      %p83 = scmp.ne.s32.totalorder %s72, %s73
      %p84 = scmp.eq.s32.totalorder %s17, 0
      %p85 = por %p83, %p84
      %p86 = scmp.ne.s32.totalorder %s72, %s73
      %p87 = scmp.eq.s32.totalorder %s18, 1
      %p88 = por %p86, %p87
      %p90 = scmp.ne.s32.totalorder %s73, %s89
      %p91 = scmp.eq.s32.totalorder %s18, 0
      %p92 = por %p90, %p91
      %p93 = scmp.le.s32.totalorder 1, %s12
      %p94 = scmp.lt.s32.totalorder %s12, 3
      %p95 = pnand %p93, %p94
      %p96 = pneg %p95
      // Predicated region
      $region9: #{tpu_custom_call.1} parent=5 // pred_check
        _
      $region10: #{tpu_custom_call.1} parent=5 // pred_check_branch
        %98 = sbr.rel (%p95) target = $region12
      $region11: #{tpu_custom_call.1} parent=5 // pred_region
        %s99 = ssub.s32 %s12, 1
        // Predicated region
        $region13: #{tpu_custom_call.1} parent=11 // pred_check
          %p100 = pneg %p59
        $region14: #{tpu_custom_call.1} parent=11 // pred_check_branch
          %102 = sbr.rel (%p100) target = $region16
        $region15: #{tpu_custom_call.1} parent=11 // pred_region
          %s104 = ssub.s32 256, 256
          %105 = vsyncadd [#allocation5], %s104
          %s106 = sshll.u32 [#allocation4], 4
          %s107 = int_to_ptr.vmem [resolvable:$true] %s106
          %112 = dma.hbm_to_vmem [thread:$0]  %s1, 256, %s107, [#allocation5], 128, 128, 8
        $region16: #{tpu_custom_call.1} parent=11 // pred_fallthru
          _
      $region12: #{tpu_custom_call.1} parent=5 // pred_fallthru
        _
      %p113 = scmp.lt.s32.totalorder %s12, 2
      // Predicated region
      $region17: #{tpu_custom_call.1} parent=5 // pred_check
        %p114 = pneg %p113
      $region18: #{tpu_custom_call.1} parent=5 // pred_check_branch
        %116 = sbr.rel (%p114) target = $region20
      $region19: #{tpu_custom_call.1} parent=5 // pred_region
        // Predicated region
        $region21: #{tpu_custom_call.1} parent=19 // pred_check
          %p117 = pneg %p32
        $region22: #{tpu_custom_call.1} parent=19 // pred_check_branch
          %119 = sbr.rel (%p117) target = $region24
        $region23: #{tpu_custom_call.1} parent=19 // pred_region
          %s120 = sand.u32 %s22, 1
          %s121 = scalar_lea.sflag [#allocation3], %s120
          %s122 = sand.u32 %s22, 1
          %s123 = smul.addr %s122, 4
          %s124 = scalar_lea.vmem [#allocation2], %s123
          %s126 = ssub.s32 64, 64
          %127 = vsyncadd %s121, %s126
          %s128 = smul.addr %s12, 64
          %s129 = scalar_lea.hbm %s0, %s128
          %s131 = sshll.u32 %s124, 4
          %s132 = int_to_ptr.vmem [resolvable:$true] %s131
          %134 = dma.hbm_to_vmem [thread:$0]  %s129, 64, %s132, %s121
        $region24: #{tpu_custom_call.1} parent=19 // pred_fallthru
          _
      $region20: #{tpu_custom_call.1} parent=5 // pred_fallthru
        _
      %p135 = scmp.le.s32.totalorder 1, %s12
      %p136 = scmp.lt.s32.totalorder %s12, 3
      %p137 = pnand %p135, %p136
      %p138 = pneg %p137
      // Predicated region
      $region25: #{tpu_custom_call.1} parent=5 // pred_check
        _
      $region26: #{tpu_custom_call.1} parent=5 // pred_check_branch
        %140 = sbr.rel (%p137) target = $region28
      $region27: #{tpu_custom_call.1} parent=5 // pred_region
        %s141 = ssub.s32 %s12, 1
        %s142 = sand.u32 %s25, 1
        %s143 = scalar_lea.sflag [#allocation3], %s142
        %s144 = sand.u32 %s25, 1
        %s145 = smul.addr %s144, 4
        %s146 = scalar_lea.vmem [#allocation2], %s145
        // Predicated region
        $region29: #{tpu_custom_call.1} parent=27 // pred_check
          %p147 = pneg %p38
        $region30: #{tpu_custom_call.1} parent=27 // pred_check_branch
          %149 = sbr.rel (%p147) target = $region32
        $region31: #{tpu_custom_call.1} parent=27 // pred_region
          %150 = dma.done %s143, 64
        $region32: #{tpu_custom_call.1} parent=27 // pred_fallthru
          _
        // Predicated region
        $region33: #{tpu_custom_call.1} parent=27 // pred_check
          %p151 = pneg %p59
        $region34: #{tpu_custom_call.1} parent=27 // pred_check_branch
          %153 = sbr.rel (%p151) target = $region36
        $region35: #{tpu_custom_call.1} parent=27 // pred_region
          %154 = dma.done [#allocation5], 256
        $region36: #{tpu_custom_call.1} parent=27 // pred_fallthru
          _
        %s155 = sand.u32 %s25, 1
        %s156 = scalar_lea.sflag [#allocation3], %s155
        %s157 = sand.u32 %s25, 1
        %s158 = smul.addr %s157, 4
        %s159 = scalar_lea.vmem [#allocation2], %s158
        %p160 = pneg %p38
        %p161 = pneg %p35
        %p162 = pneg %p59
        %p163 = pneg %p56
        %p164 = pneg %p85
        %p165 = pneg %p82
        %p166 = scmp.lt.s32.totalorder %s17, 1
        %s167 = scalar_select %p166, %s17, 1
        %s168 = smul.addr %s167, 2
        %s169 = smul.addr %s168, 8
        %s170 = scalar_lea.vmem %s2, %s169
        %p171 = scmp.lt.s32.totalorder %s17, 1
        %s172 = scalar_select %p171, %s17, 1
        %s173 = smul.addr %s172, 2
        %s174 = smul.addr %s173, 8
        %s175 = scalar_lea.vmem %s2, %s174
        %v176 = vld [vmem:[%s146] sm:$0xf]
        %v178 = vrot.slane %v176, 4
        %179 = vrot.lane.b32.xlu0 %v178, 127
        %v180 = vpop.permute.xlu0 %179
        %182 = vrot.lane.b32.xlu0 %v176, 126
        %v183 = vpop.permute.xlu0 %182
        %185 = vrot.lane.b32.xlu0 %v178, 125
        %v186 = vpop.permute.xlu0 %185
        %vm188 = vcmask 1043456
        %v189 = vsel %vm188, %v176, %v180
        %v190 = vsel %vm188, %v183, %v186
        %v191 = vld [vmem:[#allocation4] sm:$0xff]
        %v192 = vld [vmem:[#allocation4 + $0x8] sm:$0xff]
        %vm193 = vcmask 130048
        %v195 = vsel %vm193, %v191, 0
        %v198 = vsel %vm193, %v192, 0
        %200 = vmatprep.subr.mxu0 0.0
        %201 = vmatpush1.msra.mxu0 0.0
        %202 = vmatprep.subr.mxu0 0.0
        %203 = vmatpush1.msra.mxu0 0.0
        %204 = vmatprep.subr.mxu0 0.0
        %205 = vmatpush1.msra.mxu0 0.0
        %206 = vmatprep.subr.mxu0 0.0
        %207 = vmatpush1.msra.mxu0 0.0
        %208 = vmatprep.subr.mxu0 0.0
        %209 = vmatpush1.msra.mxu0 0.0
        %210 = vmatprep.subr.mxu0 0.0
        %211 = vmatpush1.msra.mxu0 0.0
        %212 = vmatprep.subr.mxu0 0.0
        %213 = vmatpush1.msra.mxu0 0.0
        %214 = vmatprep.subr.mxu0 0.0
        %215 = vmatpush1.msra.mxu0 0.0
        %216 = vmatprep.subr.mxu0 0.0
        %217 = vmatpush1.msra.mxu0 0.0
        %218 = vmatprep.subr.mxu0 0.0
        %219 = vmatpush1.msra.mxu0 0.0
        %220 = vmatprep.subr.mxu0 0.0
        %221 = vmatpush1.msra.mxu0 0.0
        %222 = vmatprep.subr.mxu0 0.0
        %223 = vmatpush1.msra.mxu0 0.0
        %224 = vmatprep.subr.mxu0 0.0
        %225 = vmatpush1.msra.mxu0 0.0
        %226 = vmatprep.subr.mxu0 0.0
        %227 = vmatpush1.msra.mxu0 0.0
        %228 = vmatprep.subr.mxu0 0.0
        %229 = vmatpush1.msra.mxu0 %v190
        %230 = vmatprep.subr.mxu0 0.0
        %231 = vmatpush1.msra.mxu0 %v189
        %232 = vmatprep.subr.mxu0 0.0
        %233 = vmatpush2.msra.mxu0 0.0
        %234 = vmatprep.subr.mxu0 0.0
        %235 = vmatpush2.msra.mxu0 0.0
        %236 = vmatprep.subr.mxu0 0.0
        %237 = vmatpush2.msra.mxu0 0.0
        %238 = vmatprep.subr.mxu0 0.0
        %239 = vmatpush2.msra.mxu0 0.0
        %240 = vmatprep.subr.mxu0 0.0
        %241 = vmatpush2.msra.mxu0 0.0
        %242 = vmatprep.subr.mxu0 0.0
        %243 = vmatpush2.msra.mxu0 0.0
        %244 = vmatprep.subr.mxu0 0.0
        %245 = vmatpush2.msra.mxu0 0.0
        %246 = vmatprep.subr.mxu0 0.0
        %247 = vmatpush2.msra.mxu0 0.0
        %248 = vmatprep.subr.mxu0 0.0
        %249 = vmatpush2.msra.mxu0 0.0
        %250 = vmatprep.subr.mxu0 0.0
        %251 = vmatpush2.msra.mxu0 0.0
        %252 = vmatprep.subr.mxu0 0.0
        %253 = vmatpush2.msra.mxu0 0.0
        %254 = vmatprep.subr.mxu0 0.0
        %255 = vmatpush2.msra.mxu0 0.0
        %256 = vmatprep.subr.mxu0 0.0
        %257 = vmatpush2.msra.mxu0 0.0
        %258 = vmatprep.subr.mxu0 0.0
        %259 = vmatpush2.msra.mxu0 0.0
        %260 = vmatprep.subr.mxu0 0.0
        %261 = vmatpush2.msra.mxu0 0.0
        %262 = vmatprep.subr.mxu0 0.0
        %263 = vmatpush2.msra.mxu0 0.0
        %264 = vmatprep.mubr.f32.mxu0 0.0
        %265 = vmatmul.mubr.f32.gmra.mxu0 %v195
        %v266 = vpop.f32.mrf.mxu0
        %v267 = vadd.f32 0.0, %v266
        %v268 = vpop.f32.mrf.mxu0
        %269 = vmatprep.mubr.f32.mxu0 0.0
        %270 = vmatmul.mubr.f32.gmra.mxu0 %v198
        %v271 = vpop.f32.mrf.mxu0
        %v272 = vadd.f32 0.0, %v271
        %v273 = vpop.f32.mrf.mxu0
        %274 = vdwg.mxu0
        %vm275 = vcmp.gt.f32.partialorder %v267, 0.0
        %vm276 = vcmp.gt.f32.partialorder %v272, 0.0
        %v277 = vmul.f32 %v267, 0.2
        %v278 = vmul.f32 %v272, 0.2
        %v279 = vsel %vm275, %v267, %v277
        %v280 = vsel %vm276, %v272, %v278
        %vm281 = vcmask 64512
        %282 = vst.msk [vmem:[%s175] sm:$0xff] %vm281, %v279
        %283 = vst.msk [vmem:[%s175 + $0x8] sm:$0xff] %vm281, %v280
        %p284 = scmp.lt.s32.totalorder %s17, 1
        %s285 = scalar_select %p284, %s17, 1
        %s286 = smul.addr %s285, 2
        %s287 = smul.addr %s286, 8
        %s288 = scalar_lea.vmem %s2, %s287
        // Predicated region
        $region37: #{tpu_custom_call.1} parent=27 // pred_check
          %p289 = pneg %p82
        $region38: #{tpu_custom_call.1} parent=27 // pred_check_branch
          %291 = sbr.rel (%p289) target = $region40
        $region39: #{tpu_custom_call.1} parent=27 // pred_region
          _
        $region40: #{tpu_custom_call.1} parent=27 // pred_fallthru
          _
      $region28: #{tpu_custom_call.1} parent=5 // pred_fallthru
        _
      %p292 = scmp.le.s32.totalorder 2, %s12
      // Predicated region
      $region41: #{tpu_custom_call.1} parent=5 // pred_check
        %p293 = pneg %p292
      $region42: #{tpu_custom_call.1} parent=5 // pred_check_branch
        %295 = sbr.rel (%p293) target = $region44
      $region43: #{tpu_custom_call.1} parent=5 // pred_region
        %s296 = ssub.s32 %s12, 2
        // Predicated region
        $region45: #{tpu_custom_call.1} parent=43 // pred_check
          %p297 = pneg %p88
        $region46: #{tpu_custom_call.1} parent=43 // pred_check_branch
          %299 = sbr.rel (%p297) target = $region48
        $region47: #{tpu_custom_call.1} parent=43 // pred_region
          %p300 = scmp.lt.s32.totalorder %s18, 1
          %s301 = scalar_select %p300, %s18, 1
          %s302 = smul.addr %s301, 2
          %s303 = smul.addr %s302, 8
          %s304 = scalar_lea.vmem %s2, %s303
        $region48: #{tpu_custom_call.1} parent=43 // pred_fallthru
          _
      $region44: #{tpu_custom_call.1} parent=5 // pred_fallthru
        _
    $region6: #{tpu_custom_call.1} parent=1 // loop_footer
      %s16 = sadd.s32 1, %s12
    $region7: #{tpu_custom_call.1} parent=1 // loop_footer_branch
      %11 = sbr.rel target = $region3
    $region8: #{tpu_custom_call.1} parent=1 // loop_exit
      _
    %305 = vsyncpa [#allocation3], 1
    %s306 = scalar_lea.sflag [#allocation3], 1
    %307 = vsyncpa %s306, 1
    %308 = vsyncpa [#allocation5], 1

</llo_original>
